<compile_context>
chip_gen: v6e
topology: v6e:2x2x1
jax: 0.10.0
libtpu: 0.0.40
codegen_flags: <defaults>
</compile_context>

<pallas_src>
import numpy as np
import jax
import jax.numpy as jnp
from jax import lax
from jax.experimental import pallas as pl
from jax.experimental.pallas import tpu as pltpu

NEG_SLOPE = 0.01  # torch.nn.LeakyReLU default negative_slope
LANE = 128


def _round_up(n, m):
    return ((n + m - 1) // m) * m


def graph_resnet_kernel(x_ref, w_in_t_ref, b_in_ref, adj_ref,
                        w_blk_ref, w_out_t_ref, b_out_ref, o_ref):
    # One batch element per grid step.
    x = x_ref[0]                                                  # (H, input_dim) f32

    # input_layer (Linear input_dim -> output_dim on last axis) + LeakyReLU.
    y = jnp.dot(x, w_in_t_ref[...],
                preferred_element_type=jnp.float32) + b_in_ref[...]
    y = jnp.where(y > 0, y, NEG_SLOPE * y)                        # (H, N_pad) f32, lane-dense

    num_blocks = w_blk_ref.shape[0]
    # Residual blocks, fully unrolled (num_blocks is a small static constant).
    for i in range(num_blocks):
        h = jnp.dot(w_blk_ref[i], y,
                    preferred_element_type=jnp.float32)           # GCN lin on feature axis
        # adj re-read from VMEM each use (cheap vld; avoids pinning N_pad^2 vregs).
        agg = jnp.dot(h, adj_ref[...],
                      preferred_element_type=jnp.float32)         # normalized 'add' aggregation
        y = jnp.tanh(agg) + y                                     # Tanh + residual

    # output_layer (Linear output_dim -> input_dim on last axis); lane-dense store.
    o_ref[0] = (jnp.dot(y, w_out_t_ref[...],
                        preferred_element_type=jnp.float32) + b_out_ref[...])


def build_norm_adj(edge_index, num_nodes):
    """Dense normalized adjacency matching GCNConv: add_self_loops + D^-1/2 A D^-1/2."""
    loops = jnp.arange(num_nodes, dtype=edge_index.dtype)
    row = jnp.concatenate([edge_index[0], loops])     # sources
    col = jnp.concatenate([edge_index[1], loops])     # targets (aggregation index)
    deg = jnp.zeros((num_nodes,), jnp.float32).at[col].add(1.0)
    deg_inv_sqrt = jnp.where(deg > 0, lax.rsqrt(deg), 0.0)  # inf -> 0 like the reference
    norm = deg_inv_sqrt[row] * deg_inv_sqrt[col]
    adj = jnp.zeros((num_nodes, num_nodes), jnp.float32).at[row, col].add(norm)
    return adj  # adj[j, i] = total norm of messages j -> i


def prepare_params(edge_index, w_in, b_in, w_blocks, w_out, b_out):
    """One-time (per model / per graph) prep: build dense adjacency and zero-pad the
    node axis and the final input_dim axis to lane multiples (128).  Returns a dict
    of ARRAYS ONLY (no Python ints) so it can be passed straight through jit."""
    output_dim, input_dim = w_in.shape           # output_dim == num graph nodes
    n_p = _round_up(output_dim, LANE)
    in_p = _round_up(input_dim, LANE)
    f32 = jnp.float32

    adj = build_norm_adj(edge_index, output_dim)
    adj_p = jnp.zeros((n_p, n_p), f32).at[:output_dim, :output_dim].set(adj)
    # Contraction (input_dim) axis of the input layer needs no padding; only the
    # node / output lane axes are padded (zero padding is exact end-to-end).
    w_in_t = w_in.T.astype(f32)                                               # (input_dim, output_dim)
    w_in_t_p = jnp.zeros((input_dim, n_p), f32).at[:, :output_dim].set(w_in_t)
    b_in_p = jnp.zeros((1, n_p), f32).at[:, :output_dim].set(b_in.astype(f32))
    w_out_t_p = jnp.zeros((n_p, in_p), f32).at[:output_dim, :input_dim].set(w_out.T.astype(f32))
    b_out_p = jnp.zeros((1, in_p), f32).at[:, :input_dim].set(b_out.astype(f32))

    return dict(w_in_t=w_in_t_p, b_in=b_in_p, adj=adj_p,
                w_blocks=w_blocks.astype(f32), w_out_t=w_out_t_p, b_out=b_out_p)


def graph_resnet(x, params):
    """Batched forward.  x: (B, hidden_dim, input_dim) f32.
    Returns the lane-dense padded output (B, hidden_dim, in_pad); the true result
    is out[..., :input_dim] (padded columns are exactly zero) — slice lazily where
    consumed.  Jit-friendly: all shapes below are static."""
    B, H, input_dim = x.shape
    n_p = params["adj"].shape[0]
    in_p = params["w_out_t"].shape[1]
    num_blocks = params["w_blocks"].shape[0]

    # Advisory cost estimate (helps XLA schedule the custom call).
    flops = B * (2 * H * input_dim * n_p
                 + num_blocks * (2 * H * H * n_p + 2 * H * n_p * n_p)
                 + 2 * H * n_p * in_p)
    bytes_accessed = 4 * (x.size + B * H * in_p
                          + sum(int(np.prod(v.shape)) for v in params.values()))
    transcendentals = B * num_blocks * H * n_p

    const2 = lambda b: (0, 0)
    const3 = lambda b: (0, 0, 0)

    out_p = pl.pallas_call(
        graph_resnet_kernel,
        out_shape=jax.ShapeDtypeStruct((B, H, in_p), jnp.float32),
        grid=(B,),
        in_specs=[
            pl.BlockSpec((1, H, input_dim), lambda b: (b, 0, 0)),        # x (per batch elem)
            pl.BlockSpec((input_dim, n_p), const2),                       # w_in_t
            pl.BlockSpec((1, n_p), const2),                               # b_in
            pl.BlockSpec((n_p, n_p), const2),                             # adj
            pl.BlockSpec((num_blocks, H, H), const3),                     # w_blocks
            pl.BlockSpec((n_p, in_p), const2),                            # w_out_t
            pl.BlockSpec((1, in_p), const2),                              # b_out
        ],
        out_specs=pl.BlockSpec((1, H, in_p), lambda b: (b, 0, 0)),
        compiler_params=pltpu.CompilerParams(
            dimension_semantics=("parallel",)),                           # 2 TCs on v7x
        cost_estimate=pl.CostEstimate(flops=flops,
                                      transcendentals=transcendentals,
                                      bytes_accessed=bytes_accessed),
    )(x,
      params["w_in_t"], params["b_in"], params["adj"],
      params["w_blocks"], params["w_out_t"], params["b_out"])
    return out_p


def graph_resnet_reference(x, edge_index, w_in, b_in, w_blocks, w_out, b_out):
    """Pure-JAX f32 reference with identical semantics (single sample) for validation."""
    num_nodes = w_in.shape[0]
    adj = build_norm_adj(edge_index, num_nodes)
    y = x @ w_in.T + b_in
    y = jnp.where(y > 0, y, NEG_SLOPE * y)
    for k in range(w_blocks.shape[0]):
        y = jnp.tanh((w_blocks[k] @ y) @ adj) + y
    return y @ w_out.T + b_out


if __name__ == "__main__":
    # Small shapes consistent with the module's forward:
    # per-sample x: (hidden_dim, input_dim); num graph nodes == output_dim.
    batch, input_dim, hidden_dim, output_dim, num_blocks = 2, 16, 32, 16, 2

    key = jax.random.PRNGKey(0)
    ks = jax.random.split(key, 6)

    def uniform_init(k, shape, fan_in):
        bound = 1.0 / np.sqrt(fan_in)
        return jax.random.uniform(k, shape, jnp.float32, -bound, bound)

    x = jax.random.normal(ks[0], (batch, hidden_dim, input_dim), jnp.float32)
    w_in = uniform_init(ks[1], (output_dim, input_dim), input_dim)            # nn.Linear(input_dim, output_dim)
    b_in = uniform_init(ks[2], (output_dim,), input_dim)
    w_blocks = uniform_init(ks[3], (num_blocks, hidden_dim, hidden_dim), hidden_dim)  # GCNConv lin (no bias)
    w_out = uniform_init(ks[4], (input_dim, output_dim), output_dim)          # nn.Linear(output_dim, input_dim)
    b_out = uniform_init(ks[5], (input_dim,), output_dim)

    # Deterministic bidirectional ring graph on output_dim nodes.
    n = output_dim
    src = jnp.arange(n, dtype=jnp.int32)
    dst = (src + 1) % n
    edge_index = jnp.stack([jnp.concatenate([src, dst]),
                            jnp.concatenate([dst, src])])     # (2, 2*n)

    # One-time prep (adjacency scatter + padding) hoisted out of the per-call path.
    params = jax.block_until_ready(
        prepare_params(edge_index, w_in, b_in, w_blocks, w_out, b_out))
    fwd = jax.jit(graph_resnet)

    out_padded = jax.block_until_ready(fwd(x, params))        # (B, H, in_pad)
    out = np.asarray(out_padded)[:, :, :input_dim]            # slice where consumed

    for b in range(batch):
        ref = graph_resnet_reference(x[b], edge_index, w_in, b_in,
                                     w_blocks, w_out, b_out)
        np.testing.assert_allclose(out[b], np.asarray(ref), rtol=2e-2, atol=2e-2)
    # Padded output columns must be exactly zero (zero-padding invariant).
    np.testing.assert_array_equal(np.asarray(out_padded)[:, :, input_dim:], 0.0)

    print("KERNEL_OK")
</pallas_src>

<mosaic_0001>
module attributes {stable_mosaic.version = 11 : i64} {
  func.func @graph_resnet_kernel(%arg0: i32, %arg1: memref<1x32x16xf32, #tpu.memory_space<vmem>>, %arg2: memref<16x128xf32, #tpu.memory_space<vmem>>, %arg3: memref<1x128xf32, #tpu.memory_space<vmem>>, %arg4: memref<128x128xf32, #tpu.memory_space<vmem>>, %arg5: memref<2x32x32xf32, #tpu.memory_space<vmem>>, %arg6: memref<128x128xf32, #tpu.memory_space<vmem>>, %arg7: memref<1x128xf32, #tpu.memory_space<vmem>>, %arg8: memref<1x32x128xf32, #tpu.memory_space<vmem>>) attributes {dimension_semantics = [#tpu.dimension_semantics<parallel>], iteration_bounds = array<i64: 2>, scalar_prefetch = 0 : i64, scratch_operands = 0 : i64, tpu.core_type = #tpu.core_type<tc>, window_params = [{transform_indices = @transform_0, window_bounds = array<i64: 1, 32, 16>}, {pipeline_mode = #tpu.pipeline_mode<synchronous>, transform_indices = @transform_1, window_bounds = array<i64: 16, 128>}, {pipeline_mode = #tpu.pipeline_mode<synchronous>, transform_indices = @transform_2, window_bounds = array<i64: 1, 128>}, {pipeline_mode = #tpu.pipeline_mode<synchronous>, transform_indices = @transform_3, window_bounds = array<i64: 128, 128>}, {pipeline_mode = #tpu.pipeline_mode<synchronous>, transform_indices = @transform_4, window_bounds = array<i64: 2, 32, 32>}, {pipeline_mode = #tpu.pipeline_mode<synchronous>, transform_indices = @transform_5, window_bounds = array<i64: 128, 128>}, {pipeline_mode = #tpu.pipeline_mode<synchronous>, transform_indices = @transform_6, window_bounds = array<i64: 1, 128>}, {transform_indices = @transform_7, window_bounds = array<i64: 1, 32, 128>}]} {
    %c0 = arith.constant 0 : index
    %c0_0 = arith.constant 0 : index
    %c0_1 = arith.constant 0 : index
    %0 = vector.load %arg1[%c0, %c0_0, %c0_1] : memref<1x32x16xf32, #tpu.memory_space<vmem>>, vector<1x32x16xf32>
    %1 = vector.shape_cast %0 : vector<1x32x16xf32> to vector<32x16xf32>
    %c0_2 = arith.constant 0 : index
    %c0_3 = arith.constant 0 : index
    %2 = vector.load %arg2[%c0_2, %c0_3] : memref<16x128xf32, #tpu.memory_space<vmem>>, vector<16x128xf32>
    %cst = arith.constant dense<0.000000e+00> : vector<32x128xf32>
    %3 = tpu.matmul %1, %2, %cst {dimension_numbers = #tpu.dot_dimension_numbers<[1], [0], [0], [1], [0, 0, 1, 1], [], []>} : vector<32x16xf32>, vector<16x128xf32>, vector<32x128xf32> -> vector<32x128xf32>
    %c0_4 = arith.constant 0 : index
    %c0_5 = arith.constant 0 : index
    %4 = vector.load %arg3[%c0_4, %c0_5] : memref<1x128xf32, #tpu.memory_space<vmem>>, vector<1x128xf32>
    %5 = vector.broadcast %4 : vector<1x128xf32> to vector<32x128xf32>
    %6 = arith.addf %3, %5 : vector<32x128xf32>
    %cst_6 = arith.constant 0.000000e+00 : f32
    %7 = vector.broadcast %cst_6 : f32 to vector<32x128xf32>
    %8 = arith.cmpf ogt, %6, %7 : vector<32x128xf32>
    %cst_7 = arith.constant 0.00999999977 : f32
    %9 = vector.broadcast %cst_7 : f32 to vector<32x128xf32>
    %10 = arith.mulf %9, %6 : vector<32x128xf32>
    %11 = arith.select %8, %6, %10 : vector<32x128xi1>, vector<32x128xf32>
    %c0_8 = arith.constant 0 : index
    %c0_9 = arith.constant 0 : index
    %c0_10 = arith.constant 0 : index
    %12 = vector.load %arg5[%c0_8, %c0_9, %c0_10] : memref<2x32x32xf32, #tpu.memory_space<vmem>>, vector<1x32x32xf32>
    %13 = vector.shape_cast %12 : vector<1x32x32xf32> to vector<32x32xf32>
    %cst_11 = arith.constant dense<0.000000e+00> : vector<32x128xf32>
    %14 = tpu.matmul %13, %11, %cst_11 {dimension_numbers = #tpu.dot_dimension_numbers<[1], [0], [0], [1], [0, 0, 1, 1], [], []>} : vector<32x32xf32>, vector<32x128xf32>, vector<32x128xf32> -> vector<32x128xf32>
    %c0_12 = arith.constant 0 : index
    %c0_13 = arith.constant 0 : index
    %15 = vector.load %arg4[%c0_12, %c0_13] : memref<128x128xf32, #tpu.memory_space<vmem>>, vector<128x128xf32>
    %cst_14 = arith.constant dense<0.000000e+00> : vector<32x128xf32>
    %16 = tpu.matmul %14, %15, %cst_14 {dimension_numbers = #tpu.dot_dimension_numbers<[1], [0], [0], [1], [0, 0, 1, 1], [], []>} : vector<32x128xf32>, vector<128x128xf32>, vector<32x128xf32> -> vector<32x128xf32>
    %17 = math.tanh %16 : vector<32x128xf32>
    %18 = arith.addf %17, %11 : vector<32x128xf32>
    %c1 = arith.constant 1 : index
    %c0_15 = arith.constant 0 : index
    %c0_16 = arith.constant 0 : index
    %19 = vector.load %arg5[%c1, %c0_15, %c0_16] : memref<2x32x32xf32, #tpu.memory_space<vmem>>, vector<1x32x32xf32>
    %20 = vector.shape_cast %19 : vector<1x32x32xf32> to vector<32x32xf32>
    %cst_17 = arith.constant dense<0.000000e+00> : vector<32x128xf32>
    %21 = tpu.matmul %20, %18, %cst_17 {dimension_numbers = #tpu.dot_dimension_numbers<[1], [0], [0], [1], [0, 0, 1, 1], [], []>} : vector<32x32xf32>, vector<32x128xf32>, vector<32x128xf32> -> vector<32x128xf32>
    %c0_18 = arith.constant 0 : index
    %c0_19 = arith.constant 0 : index
    %22 = vector.load %arg4[%c0_18, %c0_19] : memref<128x128xf32, #tpu.memory_space<vmem>>, vector<128x128xf32>
    %cst_20 = arith.constant dense<0.000000e+00> : vector<32x128xf32>
    %23 = tpu.matmul %21, %22, %cst_20 {dimension_numbers = #tpu.dot_dimension_numbers<[1], [0], [0], [1], [0, 0, 1, 1], [], []>} : vector<32x128xf32>, vector<128x128xf32>, vector<32x128xf32> -> vector<32x128xf32>
    %24 = math.tanh %23 : vector<32x128xf32>
    %25 = arith.addf %24, %18 : vector<32x128xf32>
    %c0_21 = arith.constant 0 : index
    %c0_22 = arith.constant 0 : index
    %26 = vector.load %arg6[%c0_21, %c0_22] : memref<128x128xf32, #tpu.memory_space<vmem>>, vector<128x128xf32>
    %cst_23 = arith.constant dense<0.000000e+00> : vector<32x128xf32>
    %27 = tpu.matmul %25, %26, %cst_23 {dimension_numbers = #tpu.dot_dimension_numbers<[1], [0], [0], [1], [0, 0, 1, 1], [], []>} : vector<32x128xf32>, vector<128x128xf32>, vector<32x128xf32> -> vector<32x128xf32>
    %c0_24 = arith.constant 0 : index
    %c0_25 = arith.constant 0 : index
    %28 = vector.load %arg7[%c0_24, %c0_25] : memref<1x128xf32, #tpu.memory_space<vmem>>, vector<1x128xf32>
    %29 = vector.broadcast %28 : vector<1x128xf32> to vector<32x128xf32>
    %30 = arith.addf %27, %29 : vector<32x128xf32>
    %c0_26 = arith.constant 0 : index
    %c0_27 = arith.constant 0 : index
    %c0_28 = arith.constant 0 : index
    %31 = vector.load %arg8[%c0_26, %c0_27, %c0_28] : memref<1x32x128xf32, #tpu.memory_space<vmem>>, vector<1x32x128xf32>
    %32 = vector.shape_cast %31 : vector<1x32x128xf32> to vector<32x128xf32>
    %33 = vector.shape_cast %30 : vector<32x128xf32> to vector<1x32x128xf32>
    tpu.vector_store %arg8[%c0_26, %c0_27, %c0_28], %33 {strides = array<i32>} : memref<1x32x128xf32, #tpu.memory_space<vmem>>, vector<1x32x128xf32>,
    return
  }
  func.func @transform_0(%arg0: i32) -> (i32, i32, i32) {
    %c0_i32 = arith.constant 0 : i32
    %c0_i32_0 = arith.constant 0 : i32
    %c0_i32_1 = arith.constant 0 : i32
    return %arg0, %c0_i32, %c0_i32_0 : i32, i32, i32
  }
  func.func @transform_1(%arg0: i32) -> (i32, i32) {
    %c0_i32 = arith.constant 0 : i32
    %c0_i32_0 = arith.constant 0 : i32
    %c0_i32_1 = arith.constant 0 : i32
    return %c0_i32, %c0_i32_0 : i32, i32
  }
  func.func @transform_2(%arg0: i32) -> (i32, i32) {
    %c0_i32 = arith.constant 0 : i32
    %c0_i32_0 = arith.constant 0 : i32
    %c0_i32_1 = arith.constant 0 : i32
    return %c0_i32, %c0_i32_0 : i32, i32
  }
  func.func @transform_3(%arg0: i32) -> (i32, i32) {
    %c0_i32 = arith.constant 0 : i32
    %c0_i32_0 = arith.constant 0 : i32
    %c0_i32_1 = arith.constant 0 : i32
    return %c0_i32, %c0_i32_0 : i32, i32
  }
  func.func @transform_4(%arg0: i32) -> (i32, i32, i32) {
    %c0_i32 = arith.constant 0 : i32
    %c0_i32_0 = arith.constant 0 : i32
    %c0_i32_1 = arith.constant 0 : i32
    %c0_i32_2 = arith.constant 0 : i32
    return %c0_i32, %c0_i32_0, %c0_i32_1 : i32, i32, i32
  }
  func.func @transform_5(%arg0: i32) -> (i32, i32) {
    %c0_i32 = arith.constant 0 : i32
    %c0_i32_0 = arith.constant 0 : i32
    %c0_i32_1 = arith.constant 0 : i32
    return %c0_i32, %c0_i32_0 : i32, i32
  }
  func.func @transform_6(%arg0: i32) -> (i32, i32) {
    %c0_i32 = arith.constant 0 : i32
    %c0_i32_0 = arith.constant 0 : i32
    %c0_i32_1 = arith.constant 0 : i32
    return %c0_i32, %c0_i32_0 : i32, i32
  }
  func.func @transform_7(%arg0: i32) -> (i32, i32, i32) {
    %c0_i32 = arith.constant 0 : i32
    %c0_i32_0 = arith.constant 0 : i32
    %c0_i32_1 = arith.constant 0 : i32
    return %arg0, %c0_i32, %c0_i32_0 : i32, i32, i32
  }
}

</mosaic_0001>

<llo_original>
// kernel: graph_resnet.1
$region0: #{graph_resnet.1}
  #allocation0 [shape = 'u32[]', space=smem, size = 0x4, offset = 0x4, fixed_abs, tag = 'smem constant byte address 0x4 - core index']
  #allocation1 [shape = 'u32[144,128]{1,0:T(1,128)}', space=vmem, size = 0x12000, scoped, tag = 'internal scratch']
  %s0 = inlined_call_operand.vmem [shape: f32[2,32,16], index: 0, kind: input, shape index: {}]
  %s1 = inlined_call_operand.vmem [shape: f32[16,128], index: 1, kind: input, shape index: {}]
  %s2 = inlined_call_operand.vmem [shape: f32[1,128], index: 2, kind: input, shape index: {}]
  %s3 = inlined_call_operand.hbm [shape: f32[128,128], index: 3, kind: input, shape index: {}]
  %s4 = inlined_call_operand.vmem [shape: f32[2,32,32], index: 4, kind: input, shape index: {}]
  %s5 = inlined_call_operand.hbm [shape: f32[128,128], index: 5, kind: input, shape index: {}]
  %s6 = inlined_call_operand.vmem [shape: f32[1,128], index: 6, kind: input, shape index: {}]
  %s7 = inlined_call_operand.hbm [shape: f32[2,32,128], index: 7, kind: output, shape index: {}]
  %s8 = sld [smem:[#allocation0]]
  $region69: #{graph_resnet.1} parent=0
    _
  %s10 = ssub.s32 1, %s8
  %s11 = scalar_select 0, %s10, %s8
  $region1: #{graph_resnet.1} parent=0
    #allocation2 [shape = 'u8[65536]{0}', space=vmem, size = 0x10000, scoped, tag = 'input window, operand 3, single buffered']
    #allocation3 [shape = 's32[2]{0}', space=sflag, size = 0x8, scoped, tag = 'scoped memory for graph_resnet.1']
    #allocation4 [shape = 's32[2]{0}', space=sflag, size = 0x8, scoped, tag = 'scoped memory for graph_resnet.1']
    #allocation5 [shape = 'u8[65536]{0}', space=vmem, size = 0x10000, scoped, tag = 'input window, operand 5, single buffered']
    #allocation6 [shape = 's32[1]{0}', space=sflag, size = 0x4, scoped, tag = 'scoped memory for graph_resnet.1']
    #allocation7 [shape = 'u8[32768]{0}', space=vmem, size = 0x8000, scoped, tag = 'output window, operand 0']
    %12 = vsyncpa [#allocation3], 0
    %13 = vsyncpa [#allocation6], 0
    %14 = vsyncpa [#allocation4], 0
    %s15 = scalar_lea.sflag [#allocation4], 1
    %16 = vsyncpa %s15, 0
    loop: start=0, step=1, limit=4
    $region2: #{graph_resnet.1} parent=1 // loop_pre_header
      _
    $region3: #{graph_resnet.1} parent=1 // loop_header
      %s18 = sphi 0, %s22
      %p19 = scmp.ge.s32.totalorder %s18, 4
      %s28 = sphi 0, %s30
      %s31 = sphi 0, %s28
      %s32 = sphi 0, %s31
      %s48 = sphi 0, %s32
      %s52 = sphi 0, %s52
      %s54 = sphi 0, %s52
      %s55 = sphi 0, %s54
      %s69 = sphi 0, %s55
      %s73 = sphi 0, %s73
      %s75 = sphi 0, %s73
      %s76 = sphi 0, %s75
      %s90 = sphi 0, %s76
      %s94 = sphi 0, %s94
      %s96 = sphi 0, %s94
      %s97 = sphi 0, %s96
      %s111 = sphi 0, %s97
      %s115 = sphi 0, %s115
      %s117 = sphi 0, %s115
      %s118 = sphi 0, %s117
      %s132 = sphi 0, %s118
      %s136 = sphi 0, %s136
      %s138 = sphi 0, %s136
      %s139 = sphi 0, %s138
      %s153 = sphi 0, %s139
      %s157 = sphi 0, %s157
      %s159 = sphi 0, %s157
      %s160 = sphi 0, %s159
      %s174 = sphi 0, %s160
      %s180 = sphi 0, %s182
      %s183 = sphi 0, %s180
      %s184 = sphi 0, %s183
      %s200 = sphi 0, %s184
    $region4: #{graph_resnet.1} parent=1 // loop_header_branch
      %21 = sbr.rel (%p19) target = $region8
    $region5: #{graph_resnet.1} parent=1 // loop_body
      %s23 = ssub.s32 %s18, 1
      %s24 = ssub.s32 %s18, 2
      %s25 = sadd.s32 %s18, 1
      %s26 = ssub.s32 %s18, %s25
      %p27 = scmp.eq.s32.totalorder %s26, 0
      %s29 = sadd.s32 %s28, 1
      %s30 = scalar_select %p27, %s28, %s29
      %p33 = pneg %p27
      %p34 = scmp.eq.s32.totalorder %s18, 1
      %p35 = por %p33, %p34
      %p36 = scmp.ne.s32.totalorder %s28, %s31
      %p37 = scmp.eq.s32.totalorder %s18, 0
      %p38 = por %p36, %p37
      %p39 = scmp.ne.s32.totalorder %s28, %s31
      %p40 = scmp.eq.s32.totalorder %s23, 1
      %p41 = por %p39, %p40
      %p42 = scmp.ne.s32.totalorder %s31, %s32
      %p43 = scmp.eq.s32.totalorder %s23, 0
      %p44 = por %p42, %p43
      %p45 = scmp.ne.s32.totalorder %s31, %s32
      %p46 = scmp.eq.s32.totalorder %s24, 1
      %p47 = por %p45, %p46
      %p49 = scmp.ne.s32.totalorder %s32, %s48
      %p50 = scmp.eq.s32.totalorder %s24, 0
      %p51 = por %p49, %p50
      %s53 = sadd.s32 %s52, 1
      %p56 = scmp.eq.s32.totalorder %s18, 1
      %p57 = scmp.ne.s32.totalorder %s52, %s54
      %p58 = scmp.eq.s32.totalorder %s18, 0
      %p59 = por %p57, %p58
      %p60 = scmp.ne.s32.totalorder %s52, %s54
      %p61 = scmp.eq.s32.totalorder %s23, 1
      %p62 = por %p60, %p61
      %p63 = scmp.ne.s32.totalorder %s54, %s55
      %p64 = scmp.eq.s32.totalorder %s23, 0
      %p65 = por %p63, %p64
      %p66 = scmp.ne.s32.totalorder %s54, %s55
      %p67 = scmp.eq.s32.totalorder %s24, 1
      %p68 = por %p66, %p67
      %p70 = scmp.ne.s32.totalorder %s55, %s69
      %p71 = scmp.eq.s32.totalorder %s24, 0
      %p72 = por %p70, %p71
      %s74 = sadd.s32 %s73, 1
      %p77 = scmp.eq.s32.totalorder %s18, 1
      %p78 = scmp.ne.s32.totalorder %s73, %s75
      %p79 = scmp.eq.s32.totalorder %s18, 0
      %p80 = por %p78, %p79
      %p81 = scmp.ne.s32.totalorder %s73, %s75
      %p82 = scmp.eq.s32.totalorder %s23, 1
      %p83 = por %p81, %p82
      %p84 = scmp.ne.s32.totalorder %s75, %s76
      %p85 = scmp.eq.s32.totalorder %s23, 0
      %p86 = por %p84, %p85
      %p87 = scmp.ne.s32.totalorder %s75, %s76
      %p88 = scmp.eq.s32.totalorder %s24, 1
      %p89 = por %p87, %p88
      %p91 = scmp.ne.s32.totalorder %s76, %s90
      %p92 = scmp.eq.s32.totalorder %s24, 0
      %p93 = por %p91, %p92
      %s95 = sadd.s32 %s94, 1
      %p98 = scmp.eq.s32.totalorder %s18, 1
      %p99 = scmp.ne.s32.totalorder %s94, %s96
      %p100 = scmp.eq.s32.totalorder %s18, 0
      %p101 = por %p99, %p100
      %p102 = scmp.ne.s32.totalorder %s94, %s96
      %p103 = scmp.eq.s32.totalorder %s23, 1
      %p104 = por %p102, %p103
      %p105 = scmp.ne.s32.totalorder %s96, %s97
      %p106 = scmp.eq.s32.totalorder %s23, 0
      %p107 = por %p105, %p106
      %p108 = scmp.ne.s32.totalorder %s96, %s97
      %p109 = scmp.eq.s32.totalorder %s24, 1
      %p110 = por %p108, %p109
      %p112 = scmp.ne.s32.totalorder %s97, %s111
      %p113 = scmp.eq.s32.totalorder %s24, 0
      %p114 = por %p112, %p113
      %s116 = sadd.s32 %s115, 1
      %p119 = scmp.eq.s32.totalorder %s18, 1
      %p120 = scmp.ne.s32.totalorder %s115, %s117
      %p121 = scmp.eq.s32.totalorder %s18, 0
      %p122 = por %p120, %p121
      %p123 = scmp.ne.s32.totalorder %s115, %s117
      %p124 = scmp.eq.s32.totalorder %s23, 1
      %p125 = por %p123, %p124
      %p126 = scmp.ne.s32.totalorder %s117, %s118
      %p127 = scmp.eq.s32.totalorder %s23, 0
      %p128 = por %p126, %p127
      %p129 = scmp.ne.s32.totalorder %s117, %s118
      %p130 = scmp.eq.s32.totalorder %s24, 1
      %p131 = por %p129, %p130
      %p133 = scmp.ne.s32.totalorder %s118, %s132
      %p134 = scmp.eq.s32.totalorder %s24, 0
      %p135 = por %p133, %p134
      %s137 = sadd.s32 %s136, 1
      %p140 = scmp.eq.s32.totalorder %s18, 1
      %p141 = scmp.ne.s32.totalorder %s136, %s138
      %p142 = scmp.eq.s32.totalorder %s18, 0
      %p143 = por %p141, %p142
      %p144 = scmp.ne.s32.totalorder %s136, %s138
      %p145 = scmp.eq.s32.totalorder %s23, 1
      %p146 = por %p144, %p145
      %p147 = scmp.ne.s32.totalorder %s138, %s139
      %p148 = scmp.eq.s32.totalorder %s23, 0
      %p149 = por %p147, %p148
      %p150 = scmp.ne.s32.totalorder %s138, %s139
      %p151 = scmp.eq.s32.totalorder %s24, 1
      %p152 = por %p150, %p151
      %p154 = scmp.ne.s32.totalorder %s139, %s153
      %p155 = scmp.eq.s32.totalorder %s24, 0
      %p156 = por %p154, %p155
      %s158 = sadd.s32 %s157, 1
      %p161 = scmp.eq.s32.totalorder %s18, 1
      %p162 = scmp.ne.s32.totalorder %s157, %s159
      %p163 = scmp.eq.s32.totalorder %s18, 0
      %p164 = por %p162, %p163
      %p165 = scmp.ne.s32.totalorder %s157, %s159
      %p166 = scmp.eq.s32.totalorder %s23, 1
      %p167 = por %p165, %p166
      %p168 = scmp.ne.s32.totalorder %s159, %s160
      %p169 = scmp.eq.s32.totalorder %s23, 0
      %p170 = por %p168, %p169
      %p171 = scmp.ne.s32.totalorder %s159, %s160
      %p172 = scmp.eq.s32.totalorder %s24, 1
      %p173 = por %p171, %p172
      %p175 = scmp.ne.s32.totalorder %s160, %s174
      %p176 = scmp.eq.s32.totalorder %s24, 0
      %p177 = por %p175, %p176
      %s178 = ssub.s32 %s18, %s25
      %p179 = scmp.eq.s32.totalorder %s178, 0
      %s181 = sadd.s32 %s180, 1
      %s182 = scalar_select %p179, %s180, %s181
      %p185 = pneg %p179
      %p186 = scmp.eq.s32.totalorder %s18, 1
      %p187 = por %p185, %p186
      %p188 = scmp.ne.s32.totalorder %s180, %s183
      %p189 = scmp.eq.s32.totalorder %s18, 0
      %p190 = por %p188, %p189
      %p191 = scmp.ne.s32.totalorder %s180, %s183
      %p192 = scmp.eq.s32.totalorder %s23, 1
      %p193 = por %p191, %p192
      %p194 = scmp.ne.s32.totalorder %s183, %s184
      %p195 = scmp.eq.s32.totalorder %s23, 0
      %p196 = por %p194, %p195
      %p197 = scmp.ne.s32.totalorder %s183, %s184
      %p198 = scmp.eq.s32.totalorder %s24, 1
      %p199 = por %p197, %p198
      %p201 = scmp.ne.s32.totalorder %s184, %s200
      %p202 = scmp.eq.s32.totalorder %s24, 0
      %p203 = por %p201, %p202
      %p204 = scmp.le.s32.totalorder 1, %s18
      %p205 = scmp.lt.s32.totalorder %s18, 3
      %p206 = pnand %p204, %p205
      %p207 = pneg %p206
      // Predicated region
      $region9: #{graph_resnet.1} parent=5 // pred_check
        _
      $region10: #{graph_resnet.1} parent=5 // pred_check_branch
        %209 = sbr.rel (%p206) target = $region12
      $region11: #{graph_resnet.1} parent=5 // pred_region
        %s210 = ssub.s32 %s18, 1
        // Predicated region
        $region13: #{graph_resnet.1} parent=11 // pred_check
          %p211 = pneg %p65
        $region14: #{graph_resnet.1} parent=11 // pred_check_branch
          %213 = sbr.rel (%p211) target = $region16
        $region15: #{graph_resnet.1} parent=11 // pred_region
          _
        $region16: #{graph_resnet.1} parent=11 // pred_fallthru
          _
        // Predicated region
        $region17: #{graph_resnet.1} parent=11 // pred_check
          %p214 = pneg %p86
        $region18: #{graph_resnet.1} parent=11 // pred_check_branch
          %216 = sbr.rel (%p214) target = $region20
        $region19: #{graph_resnet.1} parent=11 // pred_region
          _
        $region20: #{graph_resnet.1} parent=11 // pred_fallthru
          _
        // Predicated region
        $region21: #{graph_resnet.1} parent=11 // pred_check
          %p217 = pneg %p107
        $region22: #{graph_resnet.1} parent=11 // pred_check_branch
          %219 = sbr.rel (%p217) target = $region24
        $region23: #{graph_resnet.1} parent=11 // pred_region
          %s221 = ssub.s32 2048, 2048
          %222 = vsyncadd [#allocation3], %s221
          %s223 = sshll.u32 [#allocation2], 4
          %s224 = int_to_ptr.vmem [resolvable:$true] %s223
          %229 = dma.hbm_to_vmem [thread:$0]  %s3, 2048, %s224, [#allocation3], 128, 128, 8
        $region24: #{graph_resnet.1} parent=11 // pred_fallthru
          _
        // Predicated region
        $region25: #{graph_resnet.1} parent=11 // pred_check
          %p230 = pneg %p128
        $region26: #{graph_resnet.1} parent=11 // pred_check_branch
          %232 = sbr.rel (%p230) target = $region28
        $region27: #{graph_resnet.1} parent=11 // pred_region
          _
        $region28: #{graph_resnet.1} parent=11 // pred_fallthru
          _
        // Predicated region
        $region29: #{graph_resnet.1} parent=11 // pred_check
          %p233 = pneg %p149
        $region30: #{graph_resnet.1} parent=11 // pred_check_branch
          %235 = sbr.rel (%p233) target = $region32
        $region31: #{graph_resnet.1} parent=11 // pred_region
          %s237 = ssub.s32 2048, 2048
          %238 = vsyncadd [#allocation6], %s237
          %s239 = sshll.u32 [#allocation5], 4
          %s240 = int_to_ptr.vmem [resolvable:$true] %s239
          %245 = dma.hbm_to_vmem [thread:$0]  %s5, 2048, %s240, [#allocation6], 128, 128, 8
        $region32: #{graph_resnet.1} parent=11 // pred_fallthru
          _
        // Predicated region
        $region33: #{graph_resnet.1} parent=11 // pred_check
          %p246 = pneg %p170
        $region34: #{graph_resnet.1} parent=11 // pred_check_branch
          %248 = sbr.rel (%p246) target = $region36
        $region35: #{graph_resnet.1} parent=11 // pred_region
          _
        $region36: #{graph_resnet.1} parent=11 // pred_fallthru
          _
      $region12: #{graph_resnet.1} parent=5 // pred_fallthru
        _
      %p249 = scmp.lt.s32.totalorder %s18, 2
      // Predicated region
      $region37: #{graph_resnet.1} parent=5 // pred_check
        %p250 = pneg %p249
      $region38: #{graph_resnet.1} parent=5 // pred_check_branch
        %252 = sbr.rel (%p250) target = $region40
      $region39: #{graph_resnet.1} parent=5 // pred_region
        // Predicated region
        $region41: #{graph_resnet.1} parent=39 // pred_check
          %p253 = pneg %p38
        $region42: #{graph_resnet.1} parent=39 // pred_check_branch
          %255 = sbr.rel (%p253) target = $region44
        $region43: #{graph_resnet.1} parent=39 // pred_region
          %p256 = scmp.lt.s32.totalorder %s18, 1
          %s257 = scalar_select %p256, %s18, 1
          %s258 = smul.addr %s257, 4
          %s259 = smul.addr %s258, 8
          %s260 = scalar_lea.vmem %s0, %s259
        $region44: #{graph_resnet.1} parent=39 // pred_fallthru
          _
      $region40: #{graph_resnet.1} parent=5 // pred_fallthru
        _
      %p261 = scmp.le.s32.totalorder 1, %s18
      %p262 = scmp.lt.s32.totalorder %s18, 3
      %p263 = pnand %p261, %p262
      %p264 = pneg %p263
      // Predicated region
      $region45: #{graph_resnet.1} parent=5 // pred_check
        _
      $region46: #{graph_resnet.1} parent=5 // pred_check_branch
        %266 = sbr.rel (%p263) target = $region48
      $region47: #{graph_resnet.1} parent=5 // pred_region
        %s267 = ssub.s32 %s18, 1
        // Predicated region
        $region49: #{graph_resnet.1} parent=47 // pred_check
          %p268 = pneg %p107
        $region50: #{graph_resnet.1} parent=47 // pred_check_branch
          %270 = sbr.rel (%p268) target = $region52
        $region51: #{graph_resnet.1} parent=47 // pred_region
          %271 = dma.done [#allocation3], 2048
        $region52: #{graph_resnet.1} parent=47 // pred_fallthru
          _
        // Predicated region
        $region53: #{graph_resnet.1} parent=47 // pred_check
          %p272 = pneg %p149
        $region54: #{graph_resnet.1} parent=47 // pred_check_branch
          %274 = sbr.rel (%p272) target = $region56
        $region55: #{graph_resnet.1} parent=47 // pred_region
          %275 = dma.done [#allocation6], 2048
        $region56: #{graph_resnet.1} parent=47 // pred_fallthru
          _
        %p276 = scmp.lt.s32.totalorder %s23, 1
        %s277 = scalar_select %p276, %s23, 1
        %s278 = smul.addr %s277, 4
        %s279 = smul.addr %s278, 8
        %s280 = scalar_lea.vmem %s0, %s279
        %p281 = pneg %p44
        %p282 = pneg %p41
        %p283 = pneg %p65
        %p284 = pneg %p62
        %p285 = pneg %p86
        %p286 = pneg %p83
        %p287 = pneg %p107
        %p288 = pneg %p104
        %p289 = pneg %p128
        %p290 = pneg %p125
        %p291 = pneg %p149
        %p292 = pneg %p146
        %p293 = pneg %p170
        %p294 = pneg %p167
        %p295 = pneg %p196
        %p296 = pneg %p193
        %s297 = sand.u32 %s183, 1
        %s298 = scalar_lea.sflag [#allocation4], %s297
        %s299 = sand.u32 %s183, 1
        %s300 = smul.addr %s299, 32
        %s301 = scalar_lea.vmem [#allocation7], %s300
        %p302 = scmp.lt.s32.totalorder %s23, 1
        %s303 = scalar_select %p302, %s23, 1
        %s304 = smul.addr %s303, 4
        %s305 = smul.addr %s304, 8
        %s306 = scalar_lea.vmem %s0, %s305
        %v307 = vld [vmem:[%s306] sm:$0xff]
        %v308 = vld [vmem:[%s306 + $0x8] sm:$0xff]
        %v309 = vld [vmem:[%s306 + $0x10] sm:$0xff]
        %v310 = vld [vmem:[%s306 + $0x18] sm:$0xff]
        %v311 = vld [vmem:[%s1] sm:$0xff]
        %v312 = vld [vmem:[%s1 + $0x8] sm:$0xff]
        %v313 = vld [vmem:[%s2] sm:$0x1]
        %v315 = vlaneseq
        %v316 = vshrl.u32 %v315, 7
        %v317 = vsub.s32 0, %v316
        %v318 = vrot.slane %v313, %v317
        %vm320 = vcmask 130048
        %v322 = vsel %vm320, %v307, 0
        %v325 = vsel %vm320, %v308, 0
        %v328 = vsel %vm320, %v309, 0
        %v331 = vsel %vm320, %v310, 0
        %333 = vmatprep.subr.mxu0 0.0
        %334 = vmatpush1.msra.mxu0 0.0
        %335 = vmatprep.subr.mxu0 0.0
        %336 = vmatpush1.msra.mxu0 0.0
        %337 = vmatprep.subr.mxu0 0.0
        %338 = vmatpush1.msra.mxu0 0.0
        %339 = vmatprep.subr.mxu0 0.0
        %340 = vmatpush1.msra.mxu0 0.0
        %341 = vmatprep.subr.mxu0 0.0
        %342 = vmatpush1.msra.mxu0 0.0
        %343 = vmatprep.subr.mxu0 0.0
        %344 = vmatpush1.msra.mxu0 0.0
        %345 = vmatprep.subr.mxu0 0.0
        %346 = vmatpush1.msra.mxu0 0.0
        %347 = vmatprep.subr.mxu0 0.0
        %348 = vmatpush1.msra.mxu0 0.0
        %349 = vmatprep.subr.mxu0 0.0
        %350 = vmatpush1.msra.mxu0 0.0
        %351 = vmatprep.subr.mxu0 0.0
        %352 = vmatpush1.msra.mxu0 0.0
        %353 = vmatprep.subr.mxu0 0.0
        %354 = vmatpush1.msra.mxu0 0.0
        %355 = vmatprep.subr.mxu0 0.0
        %356 = vmatpush1.msra.mxu0 0.0
        %357 = vmatprep.subr.mxu0 0.0
        %358 = vmatpush1.msra.mxu0 0.0
        %359 = vmatprep.subr.mxu0 0.0
        %360 = vmatpush1.msra.mxu0 0.0
        %361 = vmatprep.subr.mxu0 0.0
        %362 = vmatpush1.msra.mxu0 %v312
        %363 = vmatprep.subr.mxu0 0.0
        %364 = vmatpush1.msra.mxu0 %v311
        %365 = vmatprep.subr.mxu0 0.0
        %366 = vmatpush2.msra.mxu0 0.0
        %367 = vmatprep.subr.mxu0 0.0
        %368 = vmatpush2.msra.mxu0 0.0
        %369 = vmatprep.subr.mxu0 0.0
        %370 = vmatpush2.msra.mxu0 0.0
        %371 = vmatprep.subr.mxu0 0.0
        %372 = vmatpush2.msra.mxu0 0.0
        %373 = vmatprep.subr.mxu0 0.0
        %374 = vmatpush2.msra.mxu0 0.0
        %375 = vmatprep.subr.mxu0 0.0
        %376 = vmatpush2.msra.mxu0 0.0
        %377 = vmatprep.subr.mxu0 0.0
        %378 = vmatpush2.msra.mxu0 0.0
        %379 = vmatprep.subr.mxu0 0.0
        %380 = vmatpush2.msra.mxu0 0.0
        %381 = vmatprep.subr.mxu0 0.0
        %382 = vmatpush2.msra.mxu0 0.0
        %383 = vmatprep.subr.mxu0 0.0
        %384 = vmatpush2.msra.mxu0 0.0
        %385 = vmatprep.subr.mxu0 0.0
        %386 = vmatpush2.msra.mxu0 0.0
        %387 = vmatprep.subr.mxu0 0.0
        %388 = vmatpush2.msra.mxu0 0.0
        %389 = vmatprep.subr.mxu0 0.0
        %390 = vmatpush2.msra.mxu0 0.0
        %391 = vmatprep.subr.mxu0 0.0
        %392 = vmatpush2.msra.mxu0 0.0
        %393 = vmatprep.subr.mxu0 0.0
        %394 = vmatpush2.msra.mxu0 0.0
        %395 = vmatprep.subr.mxu0 0.0
        %396 = vmatpush2.msra.mxu0 0.0
        %397 = vmatprep.mubr.f32.mxu0 0.0
        %398 = vmatmul.mubr.f32.gmra.mxu0 %v322
        %v399 = vpop.f32.mrf.mxu0
        %v400 = vadd.f32 %v318, %v399
        %v401 = vpop.f32.mrf.mxu0
        %402 = vmatprep.mubr.f32.mxu0 0.0
        %403 = vmatmul.mubr.f32.gmra.mxu0 %v325
        %v404 = vpop.f32.mrf.mxu0
        %v405 = vadd.f32 %v318, %v404
        %v406 = vpop.f32.mrf.mxu0
        %407 = vmatprep.mubr.f32.mxu0 0.0
        %408 = vmatmul.mubr.f32.gmra.mxu0 %v328
        %v409 = vpop.f32.mrf.mxu0
        %v410 = vadd.f32 %v318, %v409
        %v411 = vpop.f32.mrf.mxu0
        %412 = vmatprep.mubr.f32.mxu0 0.0
        %413 = vmatmul.mubr.f32.gmra.mxu0 %v331
        %v414 = vpop.f32.mrf.mxu0
        %v415 = vadd.f32 %v318, %v414
        %v416 = vpop.f32.mrf.mxu0
        %417 = vdwg.mxu0
        %vm418 = vcmp.gt.f32.partialorder %v400, 0.0
        %vm419 = vcmp.gt.f32.partialorder %v405, 0.0
        %vm420 = vcmp.gt.f32.partialorder %v410, 0.0
        %vm421 = vcmp.gt.f32.partialorder %v415, 0.0
        %v422 = vmul.f32 %v400, 0.01
        %v423 = vmul.f32 %v405, 0.01
        %v424 = vmul.f32 %v410, 0.01
        %v425 = vmul.f32 %v415, 0.01
        %v426 = vsel %vm418, %v400, %v422
        %v427 = vsel %vm419, %v405, %v423
        %v428 = vsel %vm420, %v410, %v424
        %v429 = vsel %vm421, %v415, %v425
        %v430 = vld [vmem:[%s4] sm:$0xff]
        %v431 = vld [vmem:[%s4 + $0x8] sm:$0xff]
        %v432 = vld [vmem:[%s4 + $0x10] sm:$0xff]
        %v433 = vld [vmem:[%s4 + $0x18] sm:$0xff]
        %vm434 = vcmask 261120
        %v436 = vsel %vm434, %v430, 0
        %v439 = vsel %vm434, %v431, 0
        %v442 = vsel %vm434, %v432, 0
        %v445 = vsel %vm434, %v433, 0
        %447 = vmatprep.subr.mxu0 0.0
        %448 = vmatpush1.msra.mxu0 0.0
        %449 = vmatprep.subr.mxu0 0.0
        %450 = vmatpush1.msra.mxu0 0.0
        %451 = vmatprep.subr.mxu0 0.0
        %452 = vmatpush1.msra.mxu0 0.0
        %453 = vmatprep.subr.mxu0 0.0
        %454 = vmatpush1.msra.mxu0 0.0
        %455 = vmatprep.subr.mxu0 0.0
        %456 = vmatpush1.msra.mxu0 0.0
        %457 = vmatprep.subr.mxu0 0.0
        %458 = vmatpush1.msra.mxu0 0.0
        %459 = vmatprep.subr.mxu0 0.0
        %460 = vmatpush1.msra.mxu0 0.0
        %461 = vmatprep.subr.mxu0 0.0
        %462 = vmatpush1.msra.mxu0 0.0
        %463 = vmatprep.subr.mxu0 0.0
        %464 = vmatpush1.msra.mxu0 0.0
        %465 = vmatprep.subr.mxu0 0.0
        %466 = vmatpush1.msra.mxu0 0.0
        %467 = vmatprep.subr.mxu0 0.0
        %468 = vmatpush1.msra.mxu0 0.0
        %469 = vmatprep.subr.mxu0 0.0
        %470 = vmatpush1.msra.mxu0 0.0
        %471 = vmatprep.subr.mxu0 0.0
        %472 = vmatpush1.msra.mxu0 %v429
        %473 = vmatprep.subr.mxu0 0.0
        %474 = vmatpush1.msra.mxu0 %v428
        %475 = vmatprep.subr.mxu0 0.0
        %476 = vmatpush1.msra.mxu0 %v427
        %477 = vmatprep.subr.mxu0 0.0
        %478 = vmatpush1.msra.mxu0 %v426
        %479 = vmatprep.subr.mxu0 0.0
        %480 = vmatpush2.msra.mxu0 0.0
        %481 = vmatprep.subr.mxu0 0.0
        %482 = vmatpush2.msra.mxu0 0.0
        %483 = vmatprep.subr.mxu0 0.0
        %484 = vmatpush2.msra.mxu0 0.0
        %485 = vmatprep.subr.mxu0 0.0
        %486 = vmatpush2.msra.mxu0 0.0
        %487 = vmatprep.subr.mxu0 0.0
        %488 = vmatpush2.msra.mxu0 0.0
        %489 = vmatprep.subr.mxu0 0.0
        %490 = vmatpush2.msra.mxu0 0.0
        %491 = vmatprep.subr.mxu0 0.0
        %492 = vmatpush2.msra.mxu0 0.0
        %493 = vmatprep.subr.mxu0 0.0
        %494 = vmatpush2.msra.mxu0 0.0
        %495 = vmatprep.subr.mxu0 0.0
        %496 = vmatpush2.msra.mxu0 0.0
        %497 = vmatprep.subr.mxu0 0.0
        %498 = vmatpush2.msra.mxu0 0.0
        %499 = vmatprep.subr.mxu0 0.0
        %500 = vmatpush2.msra.mxu0 0.0
        %501 = vmatprep.subr.mxu0 0.0
        %502 = vmatpush2.msra.mxu0 0.0
        %503 = vmatprep.subr.mxu0 0.0
        %504 = vmatpush2.msra.mxu0 0.0
        %505 = vmatprep.subr.mxu0 0.0
        %506 = vmatpush2.msra.mxu0 0.0
        %507 = vmatprep.subr.mxu0 0.0
        %508 = vmatpush2.msra.mxu0 0.0
        %509 = vmatprep.subr.mxu0 0.0
        %510 = vmatpush2.msra.mxu0 0.0
        %511 = vmatprep.mubr.f32.mxu0 0.0
        %512 = vmatmul.mubr.f32.gmra.mxu0 %v436
        %v513 = vpop.f32.mrf.mxu0
        %v514 = vadd.f32 0.0, %v513
        %v515 = vpop.f32.mrf.mxu0
        %516 = vmatprep.mubr.f32.mxu0 0.0
        %517 = vmatmul.mubr.f32.gmra.mxu0 %v439
        %v518 = vpop.f32.mrf.mxu0
        %v519 = vadd.f32 0.0, %v518
        %v520 = vpop.f32.mrf.mxu0
        %521 = vmatprep.mubr.f32.mxu0 0.0
        %522 = vmatmul.mubr.f32.gmra.mxu0 %v442
        %v523 = vpop.f32.mrf.mxu0
        %v524 = vadd.f32 0.0, %v523
        %v525 = vpop.f32.mrf.mxu0
        %526 = vmatprep.mubr.f32.mxu0 0.0
        %527 = vmatmul.mubr.f32.gmra.mxu0 %v445
        %v528 = vpop.f32.mrf.mxu0
        %v529 = vadd.f32 0.0, %v528
        %v530 = vpop.f32.mrf.mxu0
        %531 = vdwg.mxu0
        %v532 = vld [vmem:[#allocation2] sm:$0xff]
        %v533 = vld [vmem:[#allocation2 + $0x8] sm:$0xff]
        %v534 = vld [vmem:[#allocation2 + $0x10] sm:$0xff]
        %v535 = vld [vmem:[#allocation2 + $0x18] sm:$0xff]
        %v536 = vld [vmem:[#allocation2 + $0x20] sm:$0xff]
        %v537 = vld [vmem:[#allocation2 + $0x28] sm:$0xff]
        %v538 = vld [vmem:[#allocation2 + $0x30] sm:$0xff]
        %v539 = vld [vmem:[#allocation2 + $0x38] sm:$0xff]
        %v540 = vld [vmem:[#allocation2 + $0x40] sm:$0xff]
        %v541 = vld [vmem:[#allocation2 + $0x48] sm:$0xff]
        %v542 = vld [vmem:[#allocation2 + $0x50] sm:$0xff]
        %v543 = vld [vmem:[#allocation2 + $0x58] sm:$0xff]
        %v544 = vld [vmem:[#allocation2 + $0x60] sm:$0xff]
        %v545 = vld [vmem:[#allocation2 + $0x68] sm:$0xff]
        %v546 = vld [vmem:[#allocation2 + $0x70] sm:$0xff]
        %v547 = vld [vmem:[#allocation2 + $0x78] sm:$0xff]
        %548 = vmatprep.subr.mxu0 0.0
        %549 = vmatpush1.msra.mxu0 %v547
        %550 = vmatprep.subr.mxu0 0.0
        %551 = vmatpush1.msra.mxu0 %v546
        %552 = vmatprep.subr.mxu0 0.0
        %553 = vmatpush1.msra.mxu0 %v545
        %554 = vmatprep.subr.mxu0 0.0
        %555 = vmatpush1.msra.mxu0 %v544
        %556 = vmatprep.subr.mxu0 0.0
        %557 = vmatpush1.msra.mxu0 %v543
        %558 = vmatprep.subr.mxu0 0.0
        %559 = vmatpush1.msra.mxu0 %v542
        %560 = vmatprep.subr.mxu0 0.0
        %561 = vmatpush1.msra.mxu0 %v541
        %562 = vmatprep.subr.mxu0 0.0
        %563 = vmatpush1.msra.mxu0 %v540
        %564 = vmatprep.subr.mxu0 0.0
        %565 = vmatpush1.msra.mxu0 %v539
        %566 = vmatprep.subr.mxu0 0.0
        %567 = vmatpush1.msra.mxu0 %v538
        %568 = vmatprep.subr.mxu0 0.0
        %569 = vmatpush1.msra.mxu0 %v537
        %570 = vmatprep.subr.mxu0 0.0
        %571 = vmatpush1.msra.mxu0 %v536
        %572 = vmatprep.subr.mxu0 0.0
        %573 = vmatpush1.msra.mxu0 %v535
        %574 = vmatprep.subr.mxu0 0.0
        %575 = vmatpush1.msra.mxu0 %v534
        %576 = vmatprep.subr.mxu0 0.0
        %577 = vmatpush1.msra.mxu0 %v533
        %578 = vmatprep.subr.mxu0 0.0
        %579 = vmatpush1.msra.mxu0 %v532
        %580 = vmatprep.subr.mxu0 0.0
        %581 = vmatpush2.msra.mxu0 0.0
        %582 = vmatprep.subr.mxu0 0.0
        %583 = vmatpush2.msra.mxu0 0.0
        %584 = vmatprep.subr.mxu0 0.0
        %585 = vmatpush2.msra.mxu0 0.0
        %586 = vmatprep.subr.mxu0 0.0
        %587 = vmatpush2.msra.mxu0 0.0
        %588 = vmatprep.subr.mxu0 0.0
        %589 = vmatpush2.msra.mxu0 0.0
        %590 = vmatprep.subr.mxu0 0.0
        %591 = vmatpush2.msra.mxu0 0.0
        %592 = vmatprep.subr.mxu0 0.0
        %593 = vmatpush2.msra.mxu0 0.0
        %594 = vmatprep.subr.mxu0 0.0
        %595 = vmatpush2.msra.mxu0 0.0
        %596 = vmatprep.subr.mxu0 0.0
        %597 = vmatpush2.msra.mxu0 0.0
        %598 = vmatprep.subr.mxu0 0.0
        %599 = vmatpush2.msra.mxu0 0.0
        %600 = vmatprep.subr.mxu0 0.0
        %601 = vmatpush2.msra.mxu0 0.0
        %602 = vmatprep.subr.mxu0 0.0
        %603 = vmatpush2.msra.mxu0 0.0
        %604 = vmatprep.subr.mxu0 0.0
        %605 = vmatpush2.msra.mxu0 0.0
        %606 = vmatprep.subr.mxu0 0.0
        %607 = vmatpush2.msra.mxu0 0.0
        %608 = vmatprep.subr.mxu0 0.0
        %609 = vmatpush2.msra.mxu0 0.0
        %610 = vmatprep.subr.mxu0 0.0
        %611 = vmatpush2.msra.mxu0 0.0
        %612 = vmatprep.mubr.f32.mxu0 0.0
        %613 = vmatmul.mubr.f32.gmra.mxu0 %v514
        %v614 = vpop.f32.mrf.mxu0
        %v615 = vadd.f32 0.0, %v614
        %v616 = vpop.f32.mrf.mxu0
        %617 = vmatprep.mubr.f32.mxu0 0.0
        %618 = vmatmul.mubr.f32.gmra.mxu0 %v519
        %v619 = vpop.f32.mrf.mxu0
        %v620 = vadd.f32 0.0, %v619
        %v621 = vpop.f32.mrf.mxu0
        %622 = vmatprep.mubr.f32.mxu0 0.0
        %623 = vmatmul.mubr.f32.gmra.mxu0 %v524
        %v624 = vpop.f32.mrf.mxu0
        %v625 = vadd.f32 0.0, %v624
        %v626 = vpop.f32.mrf.mxu0
        %627 = vmatprep.mubr.f32.mxu0 0.0
        %628 = vmatmul.mubr.f32.gmra.mxu0 %v529
        %v629 = vpop.f32.mrf.mxu0
        %v630 = vadd.f32 0.0, %v629
        %v631 = vpop.f32.mrf.mxu0
        %632 = vdwg.mxu0
        %v633 = vtanh.pop %v615
        %v634 = vtanh.pop %v620
        %v635 = vtanh.pop %v625
        %v636 = vtanh.pop %v630
        %v637 = vadd.f32 %v633, %v426
        %v638 = vadd.f32 %v634, %v427
        %v639 = vadd.f32 %v635, %v428
        %v640 = vadd.f32 %v636, %v429
        %s641 = scalar_lea.vmem %s4, 32
        %v642 = vld [vmem:[%s641] sm:$0xff]
        %v643 = vld [vmem:[%s641 + $0x8] sm:$0xff]
        %v644 = vld [vmem:[%s641 + $0x10] sm:$0xff]
        %v645 = vld [vmem:[%s641 + $0x18] sm:$0xff]
        %v647 = vsel %vm434, %v642, 0
        %v650 = vsel %vm434, %v643, 0
        %v653 = vsel %vm434, %v644, 0
        %v656 = vsel %vm434, %v645, 0
        %658 = vmatprep.subr.mxu0 0.0
        %659 = vmatpush1.msra.mxu0 0.0
        %660 = vmatprep.subr.mxu0 0.0
        %661 = vmatpush1.msra.mxu0 0.0
        %662 = vmatprep.subr.mxu0 0.0
        %663 = vmatpush1.msra.mxu0 0.0
        %664 = vmatprep.subr.mxu0 0.0
        %665 = vmatpush1.msra.mxu0 0.0
        %666 = vmatprep.subr.mxu0 0.0
        %667 = vmatpush1.msra.mxu0 0.0
        %668 = vmatprep.subr.mxu0 0.0
        %669 = vmatpush1.msra.mxu0 0.0
        %670 = vmatprep.subr.mxu0 0.0
        %671 = vmatpush1.msra.mxu0 0.0
        %672 = vmatprep.subr.mxu0 0.0
        %673 = vmatpush1.msra.mxu0 0.0
        %674 = vmatprep.subr.mxu0 0.0
        %675 = vmatpush1.msra.mxu0 0.0
        %676 = vmatprep.subr.mxu0 0.0
        %677 = vmatpush1.msra.mxu0 0.0
        %678 = vmatprep.subr.mxu0 0.0
        %679 = vmatpush1.msra.mxu0 0.0
        %680 = vmatprep.subr.mxu0 0.0
        %681 = vmatpush1.msra.mxu0 0.0
        %682 = vmatprep.subr.mxu0 0.0
        %683 = vmatpush1.msra.mxu0 %v640
        %684 = vmatprep.subr.mxu0 0.0
        %685 = vmatpush1.msra.mxu0 %v639
        %686 = vmatprep.subr.mxu0 0.0
        %687 = vmatpush1.msra.mxu0 %v638
        %688 = vmatprep.subr.mxu0 0.0
        %689 = vmatpush1.msra.mxu0 %v637
        %690 = vmatprep.subr.mxu0 0.0
        %691 = vmatpush2.msra.mxu0 0.0
        %692 = vmatprep.subr.mxu0 0.0
        %693 = vmatpush2.msra.mxu0 0.0
        %694 = vmatprep.subr.mxu0 0.0
        %695 = vmatpush2.msra.mxu0 0.0
        %696 = vmatprep.subr.mxu0 0.0
        %697 = vmatpush2.msra.mxu0 0.0
        %698 = vmatprep.subr.mxu0 0.0
        %699 = vmatpush2.msra.mxu0 0.0
        %700 = vmatprep.subr.mxu0 0.0
        %701 = vmatpush2.msra.mxu0 0.0
        %702 = vmatprep.subr.mxu0 0.0
        %703 = vmatpush2.msra.mxu0 0.0
        %704 = vmatprep.subr.mxu0 0.0
        %705 = vmatpush2.msra.mxu0 0.0
        %706 = vmatprep.subr.mxu0 0.0
        %707 = vmatpush2.msra.mxu0 0.0
        %708 = vmatprep.subr.mxu0 0.0
        %709 = vmatpush2.msra.mxu0 0.0
        %710 = vmatprep.subr.mxu0 0.0
        %711 = vmatpush2.msra.mxu0 0.0
        %712 = vmatprep.subr.mxu0 0.0
        %713 = vmatpush2.msra.mxu0 0.0
        %714 = vmatprep.subr.mxu0 0.0
        %715 = vmatpush2.msra.mxu0 0.0
        %716 = vmatprep.subr.mxu0 0.0
        %717 = vmatpush2.msra.mxu0 0.0
        %718 = vmatprep.subr.mxu0 0.0
        %719 = vmatpush2.msra.mxu0 0.0
        %720 = vmatprep.subr.mxu0 0.0
        %721 = vmatpush2.msra.mxu0 0.0
        %722 = vmatprep.mubr.f32.mxu0 0.0
        %723 = vmatmul.mubr.f32.gmra.mxu0 %v647
        %v724 = vpop.f32.mrf.mxu0
        %v725 = vadd.f32 0.0, %v724
        %v726 = vpop.f32.mrf.mxu0
        %727 = vmatprep.mubr.f32.mxu0 0.0
        %728 = vmatmul.mubr.f32.gmra.mxu0 %v650
        %v729 = vpop.f32.mrf.mxu0
        %v730 = vadd.f32 0.0, %v729
        %v731 = vpop.f32.mrf.mxu0
        %732 = vmatprep.mubr.f32.mxu0 0.0
        %733 = vmatmul.mubr.f32.gmra.mxu0 %v653
        %v734 = vpop.f32.mrf.mxu0
        %v735 = vadd.f32 0.0, %v734
        %v736 = vpop.f32.mrf.mxu0
        %737 = vmatprep.mubr.f32.mxu0 0.0
        %738 = vmatmul.mubr.f32.gmra.mxu0 %v656
        %v739 = vpop.f32.mrf.mxu0
        %v740 = vadd.f32 0.0, %v739
        %v741 = vpop.f32.mrf.mxu0
        %742 = vdwg.mxu0
        %743 = vmatprep.subr.mxu0 0.0
        %744 = vmatpush1.msra.mxu0 %v547
        %745 = vmatprep.subr.mxu0 0.0
        %746 = vmatpush1.msra.mxu0 %v546
        %747 = vmatprep.subr.mxu0 0.0
        %748 = vmatpush1.msra.mxu0 %v545
        %749 = vmatprep.subr.mxu0 0.0
        %750 = vmatpush1.msra.mxu0 %v544
        %751 = vmatprep.subr.mxu0 0.0
        %752 = vmatpush1.msra.mxu0 %v543
        %753 = vmatprep.subr.mxu0 0.0
        %754 = vmatpush1.msra.mxu0 %v542
        %755 = vmatprep.subr.mxu0 0.0
        %756 = vmatpush1.msra.mxu0 %v541
        %757 = vmatprep.subr.mxu0 0.0
        %758 = vmatpush1.msra.mxu0 %v540
        %759 = vmatprep.subr.mxu0 0.0
        %760 = vmatpush1.msra.mxu0 %v539
        %761 = vmatprep.subr.mxu0 0.0
        %762 = vmatpush1.msra.mxu0 %v538
        %763 = vmatprep.subr.mxu0 0.0
        %764 = vmatpush1.msra.mxu0 %v537
        %765 = vmatprep.subr.mxu0 0.0
        %766 = vmatpush1.msra.mxu0 %v536
        %767 = vmatprep.subr.mxu0 0.0
        %768 = vmatpush1.msra.mxu0 %v535
        %769 = vmatprep.subr.mxu0 0.0
        %770 = vmatpush1.msra.mxu0 %v534
        %771 = vmatprep.subr.mxu0 0.0
        %772 = vmatpush1.msra.mxu0 %v533
        %773 = vmatprep.subr.mxu0 0.0
        %774 = vmatpush1.msra.mxu0 %v532
        %775 = vmatprep.subr.mxu0 0.0
        %776 = vmatpush2.msra.mxu0 0.0
        %777 = vmatprep.subr.mxu0 0.0
        %778 = vmatpush2.msra.mxu0 0.0
        %779 = vmatprep.subr.mxu0 0.0
        %780 = vmatpush2.msra.mxu0 0.0
        %781 = vmatprep.subr.mxu0 0.0
        %782 = vmatpush2.msra.mxu0 0.0
        %783 = vmatprep.subr.mxu0 0.0
        %784 = vmatpush2.msra.mxu0 0.0
        %785 = vmatprep.subr.mxu0 0.0
        %786 = vmatpush2.msra.mxu0 0.0
        %787 = vmatprep.subr.mxu0 0.0
        %788 = vmatpush2.msra.mxu0 0.0
        %789 = vmatprep.subr.mxu0 0.0
        %790 = vmatpush2.msra.mxu0 0.0
        %791 = vmatprep.subr.mxu0 0.0
        %792 = vmatpush2.msra.mxu0 0.0
        %793 = vmatprep.subr.mxu0 0.0
        %794 = vmatpush2.msra.mxu0 0.0
        %795 = vmatprep.subr.mxu0 0.0
        %796 = vmatpush2.msra.mxu0 0.0
        %797 = vmatprep.subr.mxu0 0.0
        %798 = vmatpush2.msra.mxu0 0.0
        %799 = vmatprep.subr.mxu0 0.0
        %800 = vmatpush2.msra.mxu0 0.0
        %801 = vmatprep.subr.mxu0 0.0
        %802 = vmatpush2.msra.mxu0 0.0
        %803 = vmatprep.subr.mxu0 0.0
        %804 = vmatpush2.msra.mxu0 0.0
        %805 = vmatprep.subr.mxu0 0.0
        %806 = vmatpush2.msra.mxu0 0.0
        %807 = vmatprep.mubr.f32.mxu0 0.0
        %808 = vmatmul.mubr.f32.gmra.mxu0 %v725
        %v809 = vpop.f32.mrf.mxu0
        %v810 = vadd.f32 0.0, %v809
        %v811 = vpop.f32.mrf.mxu0
        %812 = vmatprep.mubr.f32.mxu0 0.0
        %813 = vmatmul.mubr.f32.gmra.mxu0 %v730
        %v814 = vpop.f32.mrf.mxu0
        %v815 = vadd.f32 0.0, %v814
        %v816 = vpop.f32.mrf.mxu0
        %817 = vmatprep.mubr.f32.mxu0 0.0
        %818 = vmatmul.mubr.f32.gmra.mxu0 %v735
        %v819 = vpop.f32.mrf.mxu0
        %v820 = vadd.f32 0.0, %v819
        %v821 = vpop.f32.mrf.mxu0
        %822 = vmatprep.mubr.f32.mxu0 0.0
        %823 = vmatmul.mubr.f32.gmra.mxu0 %v740
        %v824 = vpop.f32.mrf.mxu0
        %v825 = vadd.f32 0.0, %v824
        %v826 = vpop.f32.mrf.mxu0
        %827 = vdwg.mxu0
        %v828 = vtanh.pop %v810
        %v829 = vtanh.pop %v815
        %v830 = vtanh.pop %v820
        %v831 = vtanh.pop %v825
        %v832 = vadd.f32 %v828, %v637
        %v833 = vadd.f32 %v829, %v638
        %v834 = vadd.f32 %v830, %v639
        %v835 = vadd.f32 %v831, %v640
        %v836 = vld [vmem:[#allocation5] sm:$0xff]
        %v837 = vld [vmem:[#allocation5 + $0x8] sm:$0xff]
        %v838 = vld [vmem:[#allocation5 + $0x10] sm:$0xff]
        %v839 = vld [vmem:[#allocation5 + $0x18] sm:$0xff]
        %v840 = vld [vmem:[#allocation5 + $0x20] sm:$0xff]
        %v841 = vld [vmem:[#allocation5 + $0x28] sm:$0xff]
        %v842 = vld [vmem:[#allocation5 + $0x30] sm:$0xff]
        %v843 = vld [vmem:[#allocation5 + $0x38] sm:$0xff]
        %v844 = vld [vmem:[#allocation5 + $0x40] sm:$0xff]
        %v845 = vld [vmem:[#allocation5 + $0x48] sm:$0xff]
        %v846 = vld [vmem:[#allocation5 + $0x50] sm:$0xff]
        %v847 = vld [vmem:[#allocation5 + $0x58] sm:$0xff]
        %v848 = vld [vmem:[#allocation5 + $0x60] sm:$0xff]
        %v849 = vld [vmem:[#allocation5 + $0x68] sm:$0xff]
        %v850 = vld [vmem:[#allocation5 + $0x70] sm:$0xff]
        %v851 = vld [vmem:[#allocation5 + $0x78] sm:$0xff]
        %v852 = vld [vmem:[%s6] sm:$0x1]
        %v854 = vlaneseq
        %v855 = vshrl.u32 %v854, 7
        %v856 = vsub.s32 0, %v855
        %v857 = vrot.slane %v852, %v856
        %859 = vmatprep.subr.mxu0 0.0
        %860 = vmatpush1.msra.mxu0 %v851
        %861 = vmatprep.subr.mxu0 0.0
        %862 = vmatpush1.msra.mxu0 %v850
        %863 = vmatprep.subr.mxu0 0.0
        %864 = vmatpush1.msra.mxu0 %v849
        %865 = vmatprep.subr.mxu0 0.0
        %866 = vmatpush1.msra.mxu0 %v848
        %867 = vmatprep.subr.mxu0 0.0
        %868 = vmatpush1.msra.mxu0 %v847
        %869 = vmatprep.subr.mxu0 0.0
        %870 = vmatpush1.msra.mxu0 %v846
        %871 = vmatprep.subr.mxu0 0.0
        %872 = vmatpush1.msra.mxu0 %v845
        %873 = vmatprep.subr.mxu0 0.0
        %874 = vmatpush1.msra.mxu0 %v844
        %875 = vmatprep.subr.mxu0 0.0
        %876 = vmatpush1.msra.mxu0 %v843
        %877 = vmatprep.subr.mxu0 0.0
        %878 = vmatpush1.msra.mxu0 %v842
        %879 = vmatprep.subr.mxu0 0.0
        %880 = vmatpush1.msra.mxu0 %v841
        %881 = vmatprep.subr.mxu0 0.0
        %882 = vmatpush1.msra.mxu0 %v840
        %883 = vmatprep.subr.mxu0 0.0
        %884 = vmatpush1.msra.mxu0 %v839
        %885 = vmatprep.subr.mxu0 0.0
        %886 = vmatpush1.msra.mxu0 %v838
        %887 = vmatprep.subr.mxu0 0.0
        %888 = vmatpush1.msra.mxu0 %v837
        %889 = vmatprep.subr.mxu0 0.0
        %890 = vmatpush1.msra.mxu0 %v836
        %891 = vmatprep.subr.mxu0 0.0
        %892 = vmatpush2.msra.mxu0 0.0
        %893 = vmatprep.subr.mxu0 0.0
        %894 = vmatpush2.msra.mxu0 0.0
        %895 = vmatprep.subr.mxu0 0.0
        %896 = vmatpush2.msra.mxu0 0.0
        %897 = vmatprep.subr.mxu0 0.0
        %898 = vmatpush2.msra.mxu0 0.0
        %899 = vmatprep.subr.mxu0 0.0
        %900 = vmatpush2.msra.mxu0 0.0
        %901 = vmatprep.subr.mxu0 0.0
        %902 = vmatpush2.msra.mxu0 0.0
        %903 = vmatprep.subr.mxu0 0.0
        %904 = vmatpush2.msra.mxu0 0.0
        %905 = vmatprep.subr.mxu0 0.0
        %906 = vmatpush2.msra.mxu0 0.0
        %907 = vmatprep.subr.mxu0 0.0
        %908 = vmatpush2.msra.mxu0 0.0
        %909 = vmatprep.subr.mxu0 0.0
        %910 = vmatpush2.msra.mxu0 0.0
        %911 = vmatprep.subr.mxu0 0.0
        %912 = vmatpush2.msra.mxu0 0.0
        %913 = vmatprep.subr.mxu0 0.0
        %914 = vmatpush2.msra.mxu0 0.0
        %915 = vmatprep.subr.mxu0 0.0
        %916 = vmatpush2.msra.mxu0 0.0
        %917 = vmatprep.subr.mxu0 0.0
        %918 = vmatpush2.msra.mxu0 0.0
        %919 = vmatprep.subr.mxu0 0.0
        %920 = vmatpush2.msra.mxu0 0.0
        %921 = vmatprep.subr.mxu0 0.0
        %922 = vmatpush2.msra.mxu0 0.0
        %923 = vmatprep.mubr.f32.mxu0 0.0
        %924 = vmatmul.mubr.f32.gmra.mxu0 %v832
        %v925 = vpop.f32.mrf.mxu0
        %v926 = vadd.f32 %v857, %v925
        %v927 = vpop.f32.mrf.mxu0
        %928 = vmatprep.mubr.f32.mxu0 0.0
        %929 = vmatmul.mubr.f32.gmra.mxu0 %v833
        %v930 = vpop.f32.mrf.mxu0
        %v931 = vadd.f32 %v857, %v930
        %v932 = vpop.f32.mrf.mxu0
        %933 = vmatprep.mubr.f32.mxu0 0.0
        %934 = vmatmul.mubr.f32.gmra.mxu0 %v834
        %v935 = vpop.f32.mrf.mxu0
        %v936 = vadd.f32 %v857, %v935
        %v937 = vpop.f32.mrf.mxu0
        %938 = vmatprep.mubr.f32.mxu0 0.0
        %939 = vmatmul.mubr.f32.gmra.mxu0 %v835
        %v940 = vpop.f32.mrf.mxu0
        %v941 = vadd.f32 %v857, %v940
        %v942 = vpop.f32.mrf.mxu0
        %943 = vdwg.mxu0
        %944 = vst [vmem:[%s301] sm:$0xff] %v926
        %945 = vst [vmem:[%s301 + $0x8] sm:$0xff] %v931
        %946 = vst [vmem:[%s301 + $0x10] sm:$0xff] %v936
        %947 = vst [vmem:[%s301 + $0x18] sm:$0xff] %v941
        %s948 = sand.u32 %s183, 1
        %s949 = scalar_lea.sflag [#allocation4], %s948
        %s950 = sand.u32 %s183, 1
        %s951 = smul.addr %s950, 32
        %s952 = scalar_lea.vmem [#allocation7], %s951
        // Predicated region
        $region57: #{graph_resnet.1} parent=47 // pred_check
          %p953 = pneg %p193
        $region58: #{graph_resnet.1} parent=47 // pred_check_branch
          %955 = sbr.rel (%p953) target = $region60
        $region59: #{graph_resnet.1} parent=47 // pred_region
          %s957 = ssub.s32 512, 512
          %958 = vsyncadd %s949, %s957
          %s959 = smul.addr %s23, 4
          %s960 = smul.addr %s959, 128
          %s961 = scalar_lea.hbm %s7, %s960
          %s962 = sshll.u32 %s952, 4
          %s963 = int_to_ptr.vmem [resolvable:$true] %s962
          %968 = dma.vmem_to_hbm [thread:$0]  %s963, 512, %s961, %s949, 128, 128, 8
        $region60: #{graph_resnet.1} parent=47 // pred_fallthru
          _
      $region48: #{graph_resnet.1} parent=5 // pred_fallthru
        _
      %p969 = scmp.le.s32.totalorder 2, %s18
      // Predicated region
      $region61: #{graph_resnet.1} parent=5 // pred_check
        %p970 = pneg %p969
      $region62: #{graph_resnet.1} parent=5 // pred_check_branch
        %972 = sbr.rel (%p970) target = $region64
      $region63: #{graph_resnet.1} parent=5 // pred_region
        %s973 = ssub.s32 %s18, 2
        // Predicated region
        $region65: #{graph_resnet.1} parent=63 // pred_check
          %p974 = pneg %p199
        $region66: #{graph_resnet.1} parent=63 // pred_check_branch
          %976 = sbr.rel (%p974) target = $region68
        $region67: #{graph_resnet.1} parent=63 // pred_region
          %s977 = sand.u32 %s184, 1
          %s978 = scalar_lea.sflag [#allocation4], %s977
          %s979 = sand.u32 %s184, 1
          %s980 = smul.addr %s979, 32
          %s981 = scalar_lea.vmem [#allocation7], %s980
          %982 = dma.done %s978, 512
        $region68: #{graph_resnet.1} parent=63 // pred_fallthru
          _
      $region64: #{graph_resnet.1} parent=5 // pred_fallthru
        _
    $region6: #{graph_resnet.1} parent=1 // loop_footer
      %s22 = sadd.s32 1, %s18
    $region7: #{graph_resnet.1} parent=1 // loop_footer_branch
      %17 = sbr.rel target = $region3
    $region8: #{graph_resnet.1} parent=1 // loop_exit
      _
    %983 = vsyncpa [#allocation3], 1
    %s984 = scalar_lea.sflag [#allocation3], 1
    %985 = vsyncpa %s984, 1
    %986 = vsyncpa [#allocation6], 1
    %987 = vsyncpa [#allocation4], 1
    %s988 = scalar_lea.sflag [#allocation4], 1
    %989 = vsyncpa %s988, 1

</llo_original>
